<compile_context>
chip_gen: v6e
topology: v6e:2x2x1
jax: 0.10.0
libtpu: 0.0.40
codegen_flags: <defaults>
</compile_context>

<pallas_src>
import jax
import jax.numpy as jnp
from jax import lax
from jax.experimental import pallas as pl
from jax.experimental.pallas import tpu as pltpu


def grcn_xui_kernel(gu_ref, gi_ref, xui_ref):
    # Elementwise product in the input dtype (VPU); the per-row reduction over
    # D runs on the MXU with f32 accumulation by contracting a ones row-vector
    # against the product on its minor (D) axis:
    #   (1, D) . (tb, D)^T -> (1, tb)
    # which yields the batch of row-sums *lane-dense* for an unmasked store.
    prod = gu_ref[...] * gi_ref[...]                        # (tb, D)
    ones_row = jnp.ones((1, prod.shape[1]), dtype=prod.dtype)
    xui_ref[...] = lax.dot_general(
        ones_row,
        prod,
        dimension_numbers=(((1,), (1,)), ((), ())),         # -> (1, tb)
        preferred_element_type=jnp.float32,
        precision=lax.Precision.HIGHEST,
    )


def _squeeze_like_torch(x):
    """torch.squeeze on the (B, D) inputs, but never drop the batch axis."""
    if x.ndim <= 2:
        return x
    axes = tuple(a for a in range(1, x.ndim) if x.shape[a] == 1)
    return jnp.squeeze(x, axis=axes) if axes else x


def _min_sublane(dtype):
    # f32 -> 8, bf16 -> 16, int8/fp8 -> 32 sublane granularity.
    return max(8, 32 // jnp.dtype(dtype).itemsize)


def _round_up(x, m):
    return ((x + m - 1) // m) * m


def grcn_forward(gu, gi, *, vmem_tile_budget_bytes=8 * 1024 * 1024):
    """Pallas implementation of GRCNModel.forward((gu, gi))."""
    gu = _squeeze_like_torch(gu)
    gi = _squeeze_like_torch(gi)
    assert gu.shape == gi.shape and gu.ndim == 2
    B, D = gu.shape
    itemsize = jnp.dtype(gu.dtype).itemsize
    min_sub = _min_sublane(gu.dtype)

    # Row tile: fill the (v7x-safe) ~8 MiB VMEM tile budget across
    # 2 inputs x 2 pipeline buffers, capped at 1024 rows (larger tiles only
    # add pipeline ramp/drain and VMEM pressure, no roofline gain).
    bytes_per_row = 4 * D * itemsize
    tb = min(B, max(min_sub, vmem_tile_budget_bytes // bytes_per_row), 1024)
    if tb >= B:
        # Whole batch fits in one block: split into >= 2 blocks when possible
        # so the "parallel" grid axis can use both TensorCores on v7x.
        if B > min_sub:
            tb = min(B, _round_up(pl.cdiv(B, 2), min_sub))
    else:
        # Sub-full blocks must respect the sublane granularity of the dtype.
        tb = max(min_sub, (tb // min_sub) * min_sub)
    num_blocks = pl.cdiv(B, tb)  # partial last block: padded rows only reach
                                 # padded output lanes (per-row op), sliced
                                 # off in the wrapper.

    tile_bytes = 4 * tb * D * itemsize + 2 * tb * 4
    vmem_limit = int(min(32 * 1024 * 1024,
                         max(2 * tile_bytes + 2 * 1024 * 1024,
                             4 * 1024 * 1024)))

    cost = pl.CostEstimate(
        flops=2 * B * D,
        transcendentals=0,
        bytes_accessed=2 * B * D * itemsize + num_blocks * tb * 4,
    )

    xui2d = pl.pallas_call(
        grcn_xui_kernel,
        out_shape=jax.ShapeDtypeStruct((num_blocks, tb), jnp.float32),
        grid_spec=pltpu.PrefetchScalarGridSpec(
            num_scalar_prefetch=0,
            grid=(num_blocks,),
            in_specs=[
                pl.BlockSpec((tb, D), lambda i: (i, 0)),
                pl.BlockSpec((tb, D), lambda i: (i, 0)),
            ],
            out_specs=pl.BlockSpec((1, tb), lambda i: (i, 0)),
        ),
        compiler_params=pltpu.CompilerParams(
            dimension_semantics=("parallel",),
            vmem_limit_bytes=vmem_limit,
        ),
        cost_estimate=cost,
    )(gu, gi)

    xui = xui2d.reshape(num_blocks * tb)[:B]
    # gamma_u / gamma_i are the squeezed inputs themselves (no kernel copies).
    return xui, gu, gi


def xavier_uniform(key, shape, dtype=jnp.float32):
    fan_in, fan_out = shape[1], shape[0]
    limit = (6.0 / (fan_in + fan_out)) ** 0.5
    return jax.random.uniform(key, shape, dtype, minval=-limit, maxval=limit)


if __name__ == "__main__":
    key = jax.random.PRNGKey(0)
    k_gu, k_gi, k_user, k_pos, k2a, k2b = jax.random.split(key, 6)

    # Small deterministic synthetic setup consistent with the module.
    num_users, num_items, embed_k = 16, 24, 32
    batch = 8

    # Embedding tables (torch.nn.Embedding + xavier_uniform_).
    Gu_weight = xavier_uniform(k_gu, (num_users, embed_k))
    Gi_weight = xavier_uniform(k_gi, (num_items, embed_k))

    # Batch of (user, positive item) indices, as in train_step.
    user_idx = jax.random.randint(k_user, (batch,), 0, num_users)
    pos_idx = jax.random.randint(k_pos, (batch,), 0, num_items)

    gu = Gu_weight[user_idx]   # (B, D)
    gi = Gi_weight[pos_idx]    # (B, D)

    xui, gamma_u, gamma_i = grcn_forward(gu, gi)
    jax.block_until_ready((xui, gamma_u, gamma_i))

    # Reference check against plain JAX semantics of the torch forward.
    xui_ref = jnp.sum(gu * gi, axis=1)
    assert xui.shape == (batch,)
    assert gamma_u.shape == (batch, embed_k)
    assert gamma_i.shape == (batch, embed_k)
    assert jnp.allclose(xui, xui_ref, atol=1e-4, rtol=1e-4)
    assert jnp.allclose(gamma_u, gu)
    assert jnp.allclose(gamma_i, gi)

    # Multi-block / megacore path: grid >= 2 with a partial tail block.
    B2, D2 = 40, 64
    gu2 = jax.random.normal(k2a, (B2, D2), jnp.float32) * 0.1
    gi2 = jax.random.normal(k2b, (B2, D2), jnp.float32) * 0.1
    xui2, gu2_out, gi2_out = grcn_forward(gu2, gi2)
    jax.block_until_ready((xui2, gu2_out, gi2_out))
    assert xui2.shape == (B2,)
    assert jnp.allclose(xui2, jnp.sum(gu2 * gi2, axis=1), atol=1e-4, rtol=1e-4)

    print("KERNEL_OK")
</pallas_src>

<mosaic_0001>
module attributes {stable_mosaic.version = 11 : i64} {
  func.func @grcn_xui_kernel(%arg0: i32, %arg1: memref<8x32xf32, #tpu.memory_space<vmem>>, %arg2: memref<8x32xf32, #tpu.memory_space<vmem>>, %arg3: memref<1x8xf32, #tpu.memory_space<vmem>>) attributes {dimension_semantics = [#tpu.dimension_semantics<parallel>], iteration_bounds = array<i64: 1>, scalar_prefetch = 0 : i64, scratch_operands = 0 : i64, tpu.core_type = #tpu.core_type<tc>, window_params = [{transform_indices = @transform_0, window_bounds = array<i64: 8, 32>}, {transform_indices = @transform_1, window_bounds = array<i64: 8, 32>}, {transform_indices = @transform_2, window_bounds = array<i64: 1, 8>}]} {
    %c0 = arith.constant 0 : index
    %c0_0 = arith.constant 0 : index
    %0 = vector.load %arg1[%c0, %c0_0] : memref<8x32xf32, #tpu.memory_space<vmem>>, vector<8x32xf32>
    %c0_1 = arith.constant 0 : index
    %c0_2 = arith.constant 0 : index
    %1 = vector.load %arg2[%c0_1, %c0_2] : memref<8x32xf32, #tpu.memory_space<vmem>>, vector<8x32xf32>
    %2 = arith.mulf %0, %1 : vector<8x32xf32>
    %cst = arith.constant 1.000000e+00 : f32
    %3 = vector.broadcast %cst : f32 to vector<1x32xf32>
    %cst_3 = arith.constant dense<0.000000e+00> : vector<1x8xf32>
    %4 = tpu.matmul %3, %2, %cst_3 {dimension_numbers = #tpu.dot_dimension_numbers<[1], [1], [0], [0], [0, 0, 1, 0], [], []>, precision = #tpu.contract_precision<fp32>} : vector<1x32xf32>, vector<8x32xf32>, vector<1x8xf32> -> vector<1x8xf32>
    %c0_4 = arith.constant 0 : index
    %c0_5 = arith.constant 0 : index
    %5 = vector.load %arg3[%c0_4, %c0_5] : memref<1x8xf32, #tpu.memory_space<vmem>>, vector<1x8xf32>
    tpu.vector_store %arg3[%c0_4, %c0_5], %4 {strides = array<i32>} : memref<1x8xf32, #tpu.memory_space<vmem>>, vector<1x8xf32>,
    return
  }
  func.func @transform_0(%arg0: i32) -> (i32, i32) {
    %c0_i32 = arith.constant 0 : i32
    %c0_i32_0 = arith.constant 0 : i32
    return %arg0, %c0_i32 : i32, i32
  }
  func.func @transform_1(%arg0: i32) -> (i32, i32) {
    %c0_i32 = arith.constant 0 : i32
    %c0_i32_0 = arith.constant 0 : i32
    return %arg0, %c0_i32 : i32, i32
  }
  func.func @transform_2(%arg0: i32) -> (i32, i32) {
    %c0_i32 = arith.constant 0 : i32
    %c0_i32_0 = arith.constant 0 : i32
    return %arg0, %c0_i32 : i32, i32
  }
}

</mosaic_0001>

<llo_original>
// kernel: tpu_custom_call.1
$region0: #{tpu_custom_call.1}
  #allocation0 [shape = 'u32[]', space=smem, size = 0x4, offset = 0x4, fixed_abs, tag = 'smem constant byte address 0x4 - core index']
  #allocation1 [shape = 'u32[144,128]{1,0:T(1,128)}', space=vmem, size = 0x12000, scoped, tag = 'internal scratch']
  %s0 = inlined_call_operand.hbm [shape: f32[8,32], index: 0, kind: input, shape index: {}]
  %s1 = inlined_call_operand.hbm [shape: f32[8,32], index: 1, kind: input, shape index: {}]
  %s2 = inlined_call_operand.hbm [shape: f32[1,8], index: 2, kind: output, shape index: {}]
  %s3 = sld [smem:[#allocation0]]
  $region26: #{tpu_custom_call.1} parent=0
    _
  %s5 = ssub.s32 1, %s3
  %s6 = scalar_select 0, %s5, %s3
  $region1: #{tpu_custom_call.1} parent=0
    #allocation2 [shape = 'u8[4096]{0}', space=vmem, size = 0x1000, scoped, tag = 'input window, operand 0, single buffered']
    #allocation3 [shape = 's32[1]{0}', space=sflag, size = 0x4, scoped, tag = 'scoped memory for tpu_custom_call.1']
    #allocation4 [shape = 's32[1]{0}', space=sflag, size = 0x4, scoped, tag = 'scoped memory for tpu_custom_call.1']
    #allocation5 [shape = 'u8[4096]{0}', space=vmem, size = 0x1000, scoped, tag = 'input window, operand 1, single buffered']
    #allocation6 [shape = 's32[1]{0}', space=sflag, size = 0x4, scoped, tag = 'scoped memory for tpu_custom_call.1']
    #allocation7 [shape = 'u8[512]{0}', space=vmem, size = 0x400, scoped, tag = 'output window, operand 0, single buffered']
    %7 = vsyncpa [#allocation3], 0
    %8 = vsyncpa [#allocation6], 0
    %9 = vsyncpa [#allocation4], 0
    // Predicated region
    $region2: #{tpu_custom_call.1} parent=1 // pred_check
      _
    $region3: #{tpu_custom_call.1} parent=1 // pred_check_branch
      %11 = sbr.rel (0) target = $region5
    $region4: #{tpu_custom_call.1} parent=1 // pred_region
      %s13 = ssub.s32 128, 128
      %14 = vsyncadd [#allocation3], %s13
      %s16 = sshll.u32 [#allocation2], 4
      %s17 = int_to_ptr.vmem [resolvable:$true] %s16
      %19 = dma.hbm_to_vmem [thread:$0]  %s0, 128, %s17, [#allocation3]
    $region5: #{tpu_custom_call.1} parent=1 // pred_fallthru
      _
    // Predicated region
    $region6: #{tpu_custom_call.1} parent=1 // pred_check
      _
    $region7: #{tpu_custom_call.1} parent=1 // pred_check_branch
      %21 = sbr.rel (0) target = $region9
    $region8: #{tpu_custom_call.1} parent=1 // pred_region
      %s23 = ssub.s32 128, 128
      %24 = vsyncadd [#allocation6], %s23
      %s26 = sshll.u32 [#allocation5], 4
      %s27 = int_to_ptr.vmem [resolvable:$true] %s26
      %29 = dma.hbm_to_vmem [thread:$0]  %s1, 128, %s27, [#allocation6]
    $region9: #{tpu_custom_call.1} parent=1 // pred_fallthru
      _
    // Predicated region
    $region10: #{tpu_custom_call.1} parent=1 // pred_check
      _
    $region11: #{tpu_custom_call.1} parent=1 // pred_check_branch
      %31 = sbr.rel (0) target = $region13
    $region12: #{tpu_custom_call.1} parent=1 // pred_region
      %32 = dma.done [#allocation3], 128
    $region13: #{tpu_custom_call.1} parent=1 // pred_fallthru
      _
    // Predicated region
    $region14: #{tpu_custom_call.1} parent=1 // pred_check
      _
    $region15: #{tpu_custom_call.1} parent=1 // pred_check_branch
      %34 = sbr.rel (0) target = $region17
    $region16: #{tpu_custom_call.1} parent=1 // pred_region
      %35 = dma.done [#allocation6], 128
    $region17: #{tpu_custom_call.1} parent=1 // pred_fallthru
      _
    %v36 = vld [vmem:[#allocation2] sm:$0xff]
    %v37 = vld [vmem:[#allocation5] sm:$0xff]
    %v38 = vmul.f32 %v36, %v37
    %vm39 = vcmask 261120
    %v41 = vsel %vm39, 1.0, 0
    %v44 = vsel %vm39, %v38, 0
    %46 = vmatprep.subr.mxu0 0.0
    %47 = vmatpush1.xpose.msra.mxu0 0.0
    %48 = vmatprep.subr.mxu0 0.0
    %49 = vmatpush1.xpose.msra.mxu0 0.0
    %50 = vmatprep.subr.mxu0 0.0
    %51 = vmatpush1.xpose.msra.mxu0 0.0
    %52 = vmatprep.subr.mxu0 0.0
    %53 = vmatpush1.xpose.msra.mxu0 0.0
    %54 = vmatprep.subr.mxu0 0.0
    %55 = vmatpush1.xpose.msra.mxu0 0.0
    %56 = vmatprep.subr.mxu0 0.0
    %57 = vmatpush1.xpose.msra.mxu0 0.0
    %58 = vmatprep.subr.mxu0 0.0
    %59 = vmatpush1.xpose.msra.mxu0 0.0
    %60 = vmatprep.subr.mxu0 0.0
    %61 = vmatpush1.xpose.msra.mxu0 0.0
    %62 = vmatprep.subr.mxu0 0.0
    %63 = vmatpush1.xpose.msra.mxu0 0.0
    %64 = vmatprep.subr.mxu0 0.0
    %65 = vmatpush1.xpose.msra.mxu0 0.0
    %66 = vmatprep.subr.mxu0 0.0
    %67 = vmatpush1.xpose.msra.mxu0 0.0
    %68 = vmatprep.subr.mxu0 0.0
    %69 = vmatpush1.xpose.msra.mxu0 0.0
    %70 = vmatprep.subr.mxu0 0.0
    %71 = vmatpush1.xpose.msra.mxu0 0.0
    %72 = vmatprep.subr.mxu0 0.0
    %73 = vmatpush1.xpose.msra.mxu0 0.0
    %74 = vmatprep.subr.mxu0 0.0
    %75 = vmatpush1.xpose.msra.mxu0 0.0
    %76 = vmatprep.subr.mxu0 0.0
    %v77 = vand.u32 %v44, 4294901760
    %78 = vmatpush1.xpose.msra.mxu0 %v77
    %79 = vmatprep.subr.mxu0 0.0
    %80 = vmatpush2.xpose.msra.mxu0 0.0
    %81 = vmatprep.subr.mxu0 0.0
    %82 = vmatpush2.xpose.msra.mxu0 0.0
    %83 = vmatprep.subr.mxu0 0.0
    %84 = vmatpush2.xpose.msra.mxu0 0.0
    %85 = vmatprep.subr.mxu0 0.0
    %86 = vmatpush2.xpose.msra.mxu0 0.0
    %87 = vmatprep.subr.mxu0 0.0
    %88 = vmatpush2.xpose.msra.mxu0 0.0
    %89 = vmatprep.subr.mxu0 0.0
    %90 = vmatpush2.xpose.msra.mxu0 0.0
    %91 = vmatprep.subr.mxu0 0.0
    %92 = vmatpush2.xpose.msra.mxu0 0.0
    %93 = vmatprep.subr.mxu0 0.0
    %94 = vmatpush2.xpose.msra.mxu0 0.0
    %95 = vmatprep.subr.mxu0 0.0
    %96 = vmatpush2.xpose.msra.mxu0 0.0
    %97 = vmatprep.subr.mxu0 0.0
    %98 = vmatpush2.xpose.msra.mxu0 0.0
    %99 = vmatprep.subr.mxu0 0.0
    %100 = vmatpush2.xpose.msra.mxu0 0.0
    %101 = vmatprep.subr.mxu0 0.0
    %102 = vmatpush2.xpose.msra.mxu0 0.0
    %103 = vmatprep.subr.mxu0 0.0
    %104 = vmatpush2.xpose.msra.mxu0 0.0
    %105 = vmatprep.subr.mxu0 0.0
    %106 = vmatpush2.xpose.msra.mxu0 0.0
    %107 = vmatprep.subr.mxu0 0.0
    %108 = vmatpush2.xpose.msra.mxu0 0.0
    %109 = vmatprep.subr.mxu0 0.0
    %110 = vmatpush2.xpose.msra.mxu0 0.0
    %111 = vmatprep.mubr.f32.mxu0 0.0
    %v112 = vand.u32 %v41, 4294901760
    %v113 = vsub.f32 %v41, %v112
    %v114 = vand.u32 %v113, 4294901760
    %v115 = vsub.f32 %v113, %v114
    %v116 = vand.u32 %v115, 4294901760
    %117 = vmatmul.mubr.f32.gmra.mxu0 %v116
    %v118 = vpop.f32.mrf.mxu0
    %v119 = vadd.f32 0.0, %v118
    %v120 = vpop.f32.mrf.mxu0
    %121 = vdwg.mxu0
    %122 = vmatprep.subr.mxu0 0.0
    %123 = vmatpush1.xpose.msra.mxu0 0.0
    %124 = vmatprep.subr.mxu0 0.0
    %125 = vmatpush1.xpose.msra.mxu0 0.0
    %126 = vmatprep.subr.mxu0 0.0
    %127 = vmatpush1.xpose.msra.mxu0 0.0
    %128 = vmatprep.subr.mxu0 0.0
    %129 = vmatpush1.xpose.msra.mxu0 0.0
    %130 = vmatprep.subr.mxu0 0.0
    %131 = vmatpush1.xpose.msra.mxu0 0.0
    %132 = vmatprep.subr.mxu0 0.0
    %133 = vmatpush1.xpose.msra.mxu0 0.0
    %134 = vmatprep.subr.mxu0 0.0
    %135 = vmatpush1.xpose.msra.mxu0 0.0
    %136 = vmatprep.subr.mxu0 0.0
    %137 = vmatpush1.xpose.msra.mxu0 0.0
    %138 = vmatprep.subr.mxu0 0.0
    %139 = vmatpush1.xpose.msra.mxu0 0.0
    %140 = vmatprep.subr.mxu0 0.0
    %141 = vmatpush1.xpose.msra.mxu0 0.0
    %142 = vmatprep.subr.mxu0 0.0
    %143 = vmatpush1.xpose.msra.mxu0 0.0
    %144 = vmatprep.subr.mxu0 0.0
    %145 = vmatpush1.xpose.msra.mxu0 0.0
    %146 = vmatprep.subr.mxu0 0.0
    %147 = vmatpush1.xpose.msra.mxu0 0.0
    %148 = vmatprep.subr.mxu0 0.0
    %149 = vmatpush1.xpose.msra.mxu0 0.0
    %150 = vmatprep.subr.mxu0 0.0
    %151 = vmatpush1.xpose.msra.mxu0 0.0
    %152 = vmatprep.subr.mxu0 0.0
    %v153 = vand.u32 %v44, 4294901760
    %v154 = vsub.f32 %v44, %v153
    %v155 = vand.u32 %v154, 4294901760
    %v156 = vsub.f32 %v154, %v155
    %v157 = vand.u32 %v156, 4294901760
    %158 = vmatpush1.xpose.msra.mxu0 %v157
    %159 = vmatprep.subr.mxu0 0.0
    %160 = vmatpush2.xpose.msra.mxu0 0.0
    %161 = vmatprep.subr.mxu0 0.0
    %162 = vmatpush2.xpose.msra.mxu0 0.0
    %163 = vmatprep.subr.mxu0 0.0
    %164 = vmatpush2.xpose.msra.mxu0 0.0
    %165 = vmatprep.subr.mxu0 0.0
    %166 = vmatpush2.xpose.msra.mxu0 0.0
    %167 = vmatprep.subr.mxu0 0.0
    %168 = vmatpush2.xpose.msra.mxu0 0.0
    %169 = vmatprep.subr.mxu0 0.0
    %170 = vmatpush2.xpose.msra.mxu0 0.0
    %171 = vmatprep.subr.mxu0 0.0
    %172 = vmatpush2.xpose.msra.mxu0 0.0
    %173 = vmatprep.subr.mxu0 0.0
    %174 = vmatpush2.xpose.msra.mxu0 0.0
    %175 = vmatprep.subr.mxu0 0.0
    %176 = vmatpush2.xpose.msra.mxu0 0.0
    %177 = vmatprep.subr.mxu0 0.0
    %178 = vmatpush2.xpose.msra.mxu0 0.0
    %179 = vmatprep.subr.mxu0 0.0
    %180 = vmatpush2.xpose.msra.mxu0 0.0
    %181 = vmatprep.subr.mxu0 0.0
    %182 = vmatpush2.xpose.msra.mxu0 0.0
    %183 = vmatprep.subr.mxu0 0.0
    %184 = vmatpush2.xpose.msra.mxu0 0.0
    %185 = vmatprep.subr.mxu0 0.0
    %186 = vmatpush2.xpose.msra.mxu0 0.0
    %187 = vmatprep.subr.mxu0 0.0
    %188 = vmatpush2.xpose.msra.mxu0 0.0
    %189 = vmatprep.subr.mxu0 0.0
    %190 = vmatpush2.xpose.msra.mxu0 0.0
    %191 = vmatprep.mubr.f32.mxu0 0.0
    %v192 = vand.u32 %v41, 4294901760
    %193 = vmatmul.mubr.f32.gmra.mxu0 %v192
    %v194 = vpop.f32.mrf.mxu0
    %v195 = vadd.f32 %v119, %v194
    %v196 = vpop.f32.mrf.mxu0
    %197 = vdwg.mxu0
    %198 = vmatprep.subr.mxu0 0.0
    %199 = vmatpush1.xpose.msra.mxu0 0.0
    %200 = vmatprep.subr.mxu0 0.0
    %201 = vmatpush1.xpose.msra.mxu0 0.0
    %202 = vmatprep.subr.mxu0 0.0
    %203 = vmatpush1.xpose.msra.mxu0 0.0
    %204 = vmatprep.subr.mxu0 0.0
    %205 = vmatpush1.xpose.msra.mxu0 0.0
    %206 = vmatprep.subr.mxu0 0.0
    %207 = vmatpush1.xpose.msra.mxu0 0.0
    %208 = vmatprep.subr.mxu0 0.0
    %209 = vmatpush1.xpose.msra.mxu0 0.0
    %210 = vmatprep.subr.mxu0 0.0
    %211 = vmatpush1.xpose.msra.mxu0 0.0
    %212 = vmatprep.subr.mxu0 0.0
    %213 = vmatpush1.xpose.msra.mxu0 0.0
    %214 = vmatprep.subr.mxu0 0.0
    %215 = vmatpush1.xpose.msra.mxu0 0.0
    %216 = vmatprep.subr.mxu0 0.0
    %217 = vmatpush1.xpose.msra.mxu0 0.0
    %218 = vmatprep.subr.mxu0 0.0
    %219 = vmatpush1.xpose.msra.mxu0 0.0
    %220 = vmatprep.subr.mxu0 0.0
    %221 = vmatpush1.xpose.msra.mxu0 0.0
    %222 = vmatprep.subr.mxu0 0.0
    %223 = vmatpush1.xpose.msra.mxu0 0.0
    %224 = vmatprep.subr.mxu0 0.0
    %225 = vmatpush1.xpose.msra.mxu0 0.0
    %226 = vmatprep.subr.mxu0 0.0
    %227 = vmatpush1.xpose.msra.mxu0 0.0
    %228 = vmatprep.subr.mxu0 0.0
    %v229 = vand.u32 %v44, 4294901760
    %v230 = vsub.f32 %v44, %v229
    %231 = vmatpush1.xpose.msra.mxu0 %v230
    %232 = vmatprep.subr.mxu0 0.0
    %233 = vmatpush2.xpose.msra.mxu0 0.0
    %234 = vmatprep.subr.mxu0 0.0
    %235 = vmatpush2.xpose.msra.mxu0 0.0
    %236 = vmatprep.subr.mxu0 0.0
    %237 = vmatpush2.xpose.msra.mxu0 0.0
    %238 = vmatprep.subr.mxu0 0.0
    %239 = vmatpush2.xpose.msra.mxu0 0.0
    %240 = vmatprep.subr.mxu0 0.0
    %241 = vmatpush2.xpose.msra.mxu0 0.0
    %242 = vmatprep.subr.mxu0 0.0
    %243 = vmatpush2.xpose.msra.mxu0 0.0
    %244 = vmatprep.subr.mxu0 0.0
    %245 = vmatpush2.xpose.msra.mxu0 0.0
    %246 = vmatprep.subr.mxu0 0.0
    %247 = vmatpush2.xpose.msra.mxu0 0.0
    %248 = vmatprep.subr.mxu0 0.0
    %249 = vmatpush2.xpose.msra.mxu0 0.0
    %250 = vmatprep.subr.mxu0 0.0
    %251 = vmatpush2.xpose.msra.mxu0 0.0
    %252 = vmatprep.subr.mxu0 0.0
    %253 = vmatpush2.xpose.msra.mxu0 0.0
    %254 = vmatprep.subr.mxu0 0.0
    %255 = vmatpush2.xpose.msra.mxu0 0.0
    %256 = vmatprep.subr.mxu0 0.0
    %257 = vmatpush2.xpose.msra.mxu0 0.0
    %258 = vmatprep.subr.mxu0 0.0
    %259 = vmatpush2.xpose.msra.mxu0 0.0
    %260 = vmatprep.subr.mxu0 0.0
    %261 = vmatpush2.xpose.msra.mxu0 0.0
    %262 = vmatprep.subr.mxu0 0.0
    %263 = vmatpush2.xpose.msra.mxu0 0.0
    %264 = vmatprep.mubr.f32.mxu0 0.0
    %v265 = vand.u32 %v41, 4294901760
    %v266 = vsub.f32 %v41, %v265
    %267 = vmatmul.mubr.f32.gmra.mxu0 %v266
    %v268 = vpop.f32.mrf.mxu0
    %v269 = vadd.f32 %v195, %v268
    %v270 = vpop.f32.mrf.mxu0
    %271 = vdwg.mxu0
    %272 = vmatprep.subr.mxu0 0.0
    %273 = vmatpush1.xpose.msra.mxu0 0.0
    %274 = vmatprep.subr.mxu0 0.0
    %275 = vmatpush1.xpose.msra.mxu0 0.0
    %276 = vmatprep.subr.mxu0 0.0
    %277 = vmatpush1.xpose.msra.mxu0 0.0
    %278 = vmatprep.subr.mxu0 0.0
    %279 = vmatpush1.xpose.msra.mxu0 0.0
    %280 = vmatprep.subr.mxu0 0.0
    %281 = vmatpush1.xpose.msra.mxu0 0.0
    %282 = vmatprep.subr.mxu0 0.0
    %283 = vmatpush1.xpose.msra.mxu0 0.0
    %284 = vmatprep.subr.mxu0 0.0
    %285 = vmatpush1.xpose.msra.mxu0 0.0
    %286 = vmatprep.subr.mxu0 0.0
    %287 = vmatpush1.xpose.msra.mxu0 0.0
    %288 = vmatprep.subr.mxu0 0.0
    %289 = vmatpush1.xpose.msra.mxu0 0.0
    %290 = vmatprep.subr.mxu0 0.0
    %291 = vmatpush1.xpose.msra.mxu0 0.0
    %292 = vmatprep.subr.mxu0 0.0
    %293 = vmatpush1.xpose.msra.mxu0 0.0
    %294 = vmatprep.subr.mxu0 0.0
    %295 = vmatpush1.xpose.msra.mxu0 0.0
    %296 = vmatprep.subr.mxu0 0.0
    %297 = vmatpush1.xpose.msra.mxu0 0.0
    %298 = vmatprep.subr.mxu0 0.0
    %299 = vmatpush1.xpose.msra.mxu0 0.0
    %300 = vmatprep.subr.mxu0 0.0
    %301 = vmatpush1.xpose.msra.mxu0 0.0
    %302 = vmatprep.subr.mxu0 0.0
    %v303 = vand.u32 %v44, 4294901760
    %304 = vmatpush1.xpose.msra.mxu0 %v303
    %305 = vmatprep.subr.mxu0 0.0
    %306 = vmatpush2.xpose.msra.mxu0 0.0
    %307 = vmatprep.subr.mxu0 0.0
    %308 = vmatpush2.xpose.msra.mxu0 0.0
    %309 = vmatprep.subr.mxu0 0.0
    %310 = vmatpush2.xpose.msra.mxu0 0.0
    %311 = vmatprep.subr.mxu0 0.0
    %312 = vmatpush2.xpose.msra.mxu0 0.0
    %313 = vmatprep.subr.mxu0 0.0
    %314 = vmatpush2.xpose.msra.mxu0 0.0
    %315 = vmatprep.subr.mxu0 0.0
    %316 = vmatpush2.xpose.msra.mxu0 0.0
    %317 = vmatprep.subr.mxu0 0.0
    %318 = vmatpush2.xpose.msra.mxu0 0.0
    %319 = vmatprep.subr.mxu0 0.0
    %320 = vmatpush2.xpose.msra.mxu0 0.0
    %321 = vmatprep.subr.mxu0 0.0
    %322 = vmatpush2.xpose.msra.mxu0 0.0
    %323 = vmatprep.subr.mxu0 0.0
    %324 = vmatpush2.xpose.msra.mxu0 0.0
    %325 = vmatprep.subr.mxu0 0.0
    %326 = vmatpush2.xpose.msra.mxu0 0.0
    %327 = vmatprep.subr.mxu0 0.0
    %328 = vmatpush2.xpose.msra.mxu0 0.0
    %329 = vmatprep.subr.mxu0 0.0
    %330 = vmatpush2.xpose.msra.mxu0 0.0
    %331 = vmatprep.subr.mxu0 0.0
    %332 = vmatpush2.xpose.msra.mxu0 0.0
    %333 = vmatprep.subr.mxu0 0.0
    %334 = vmatpush2.xpose.msra.mxu0 0.0
    %335 = vmatprep.subr.mxu0 0.0
    %336 = vmatpush2.xpose.msra.mxu0 0.0
    %337 = vmatprep.mubr.f32.mxu0 0.0
    %v338 = vand.u32 %v41, 4294901760
    %v339 = vsub.f32 %v41, %v338
    %v340 = vand.u32 %v339, 4294901760
    %341 = vmatmul.mubr.f32.gmra.mxu0 %v340
    %v342 = vpop.f32.mrf.mxu0
    %v343 = vadd.f32 %v269, %v342
    %v344 = vpop.f32.mrf.mxu0
    %345 = vdwg.mxu0
    %346 = vmatprep.subr.mxu0 0.0
    %347 = vmatpush1.xpose.msra.mxu0 0.0
    %348 = vmatprep.subr.mxu0 0.0
    %349 = vmatpush1.xpose.msra.mxu0 0.0
    %350 = vmatprep.subr.mxu0 0.0
    %351 = vmatpush1.xpose.msra.mxu0 0.0
    %352 = vmatprep.subr.mxu0 0.0
    %353 = vmatpush1.xpose.msra.mxu0 0.0
    %354 = vmatprep.subr.mxu0 0.0
    %355 = vmatpush1.xpose.msra.mxu0 0.0
    %356 = vmatprep.subr.mxu0 0.0
    %357 = vmatpush1.xpose.msra.mxu0 0.0
    %358 = vmatprep.subr.mxu0 0.0
    %359 = vmatpush1.xpose.msra.mxu0 0.0
    %360 = vmatprep.subr.mxu0 0.0
    %361 = vmatpush1.xpose.msra.mxu0 0.0
    %362 = vmatprep.subr.mxu0 0.0
    %363 = vmatpush1.xpose.msra.mxu0 0.0
    %364 = vmatprep.subr.mxu0 0.0
    %365 = vmatpush1.xpose.msra.mxu0 0.0
    %366 = vmatprep.subr.mxu0 0.0
    %367 = vmatpush1.xpose.msra.mxu0 0.0
    %368 = vmatprep.subr.mxu0 0.0
    %369 = vmatpush1.xpose.msra.mxu0 0.0
    %370 = vmatprep.subr.mxu0 0.0
    %371 = vmatpush1.xpose.msra.mxu0 0.0
    %372 = vmatprep.subr.mxu0 0.0
    %373 = vmatpush1.xpose.msra.mxu0 0.0
    %374 = vmatprep.subr.mxu0 0.0
    %375 = vmatpush1.xpose.msra.mxu0 0.0
    %376 = vmatprep.subr.mxu0 0.0
    %v377 = vand.u32 %v44, 4294901760
    %v378 = vsub.f32 %v44, %v377
    %v379 = vand.u32 %v378, 4294901760
    %380 = vmatpush1.xpose.msra.mxu0 %v379
    %381 = vmatprep.subr.mxu0 0.0
    %382 = vmatpush2.xpose.msra.mxu0 0.0
    %383 = vmatprep.subr.mxu0 0.0
    %384 = vmatpush2.xpose.msra.mxu0 0.0
    %385 = vmatprep.subr.mxu0 0.0
    %386 = vmatpush2.xpose.msra.mxu0 0.0
    %387 = vmatprep.subr.mxu0 0.0
    %388 = vmatpush2.xpose.msra.mxu0 0.0
    %389 = vmatprep.subr.mxu0 0.0
    %390 = vmatpush2.xpose.msra.mxu0 0.0
    %391 = vmatprep.subr.mxu0 0.0
    %392 = vmatpush2.xpose.msra.mxu0 0.0
    %393 = vmatprep.subr.mxu0 0.0
    %394 = vmatpush2.xpose.msra.mxu0 0.0
    %395 = vmatprep.subr.mxu0 0.0
    %396 = vmatpush2.xpose.msra.mxu0 0.0
    %397 = vmatprep.subr.mxu0 0.0
    %398 = vmatpush2.xpose.msra.mxu0 0.0
    %399 = vmatprep.subr.mxu0 0.0
    %400 = vmatpush2.xpose.msra.mxu0 0.0
    %401 = vmatprep.subr.mxu0 0.0
    %402 = vmatpush2.xpose.msra.mxu0 0.0
    %403 = vmatprep.subr.mxu0 0.0
    %404 = vmatpush2.xpose.msra.mxu0 0.0
    %405 = vmatprep.subr.mxu0 0.0
    %406 = vmatpush2.xpose.msra.mxu0 0.0
    %407 = vmatprep.subr.mxu0 0.0
    %408 = vmatpush2.xpose.msra.mxu0 0.0
    %409 = vmatprep.subr.mxu0 0.0
    %410 = vmatpush2.xpose.msra.mxu0 0.0
    %411 = vmatprep.subr.mxu0 0.0
    %412 = vmatpush2.xpose.msra.mxu0 0.0
    %413 = vmatprep.mubr.f32.mxu0 0.0
    %v414 = vand.u32 %v41, 4294901760
    %415 = vmatmul.mubr.f32.gmra.mxu0 %v414
    %v416 = vpop.f32.mrf.mxu0
    %v417 = vadd.f32 %v343, %v416
    %v418 = vpop.f32.mrf.mxu0
    %419 = vdwg.mxu0
    %420 = vmatprep.subr.mxu0 0.0
    %421 = vmatpush1.xpose.msra.mxu0 0.0
    %422 = vmatprep.subr.mxu0 0.0
    %423 = vmatpush1.xpose.msra.mxu0 0.0
    %424 = vmatprep.subr.mxu0 0.0
    %425 = vmatpush1.xpose.msra.mxu0 0.0
    %426 = vmatprep.subr.mxu0 0.0
    %427 = vmatpush1.xpose.msra.mxu0 0.0
    %428 = vmatprep.subr.mxu0 0.0
    %429 = vmatpush1.xpose.msra.mxu0 0.0
    %430 = vmatprep.subr.mxu0 0.0
    %431 = vmatpush1.xpose.msra.mxu0 0.0
    %432 = vmatprep.subr.mxu0 0.0
    %433 = vmatpush1.xpose.msra.mxu0 0.0
    %434 = vmatprep.subr.mxu0 0.0
    %435 = vmatpush1.xpose.msra.mxu0 0.0
    %436 = vmatprep.subr.mxu0 0.0
    %437 = vmatpush1.xpose.msra.mxu0 0.0
    %438 = vmatprep.subr.mxu0 0.0
    %439 = vmatpush1.xpose.msra.mxu0 0.0
    %440 = vmatprep.subr.mxu0 0.0
    %441 = vmatpush1.xpose.msra.mxu0 0.0
    %442 = vmatprep.subr.mxu0 0.0
    %443 = vmatpush1.xpose.msra.mxu0 0.0
    %444 = vmatprep.subr.mxu0 0.0
    %445 = vmatpush1.xpose.msra.mxu0 0.0
    %446 = vmatprep.subr.mxu0 0.0
    %447 = vmatpush1.xpose.msra.mxu0 0.0
    %448 = vmatprep.subr.mxu0 0.0
    %449 = vmatpush1.xpose.msra.mxu0 0.0
    %450 = vmatprep.subr.mxu0 0.0
    %v451 = vand.u32 %v44, 4294901760
    %452 = vmatpush1.xpose.msra.mxu0 %v451
    %453 = vmatprep.subr.mxu0 0.0
    %454 = vmatpush2.xpose.msra.mxu0 0.0
    %455 = vmatprep.subr.mxu0 0.0
    %456 = vmatpush2.xpose.msra.mxu0 0.0
    %457 = vmatprep.subr.mxu0 0.0
    %458 = vmatpush2.xpose.msra.mxu0 0.0
    %459 = vmatprep.subr.mxu0 0.0
    %460 = vmatpush2.xpose.msra.mxu0 0.0
    %461 = vmatprep.subr.mxu0 0.0
    %462 = vmatpush2.xpose.msra.mxu0 0.0
    %463 = vmatprep.subr.mxu0 0.0
    %464 = vmatpush2.xpose.msra.mxu0 0.0
    %465 = vmatprep.subr.mxu0 0.0
    %466 = vmatpush2.xpose.msra.mxu0 0.0
    %467 = vmatprep.subr.mxu0 0.0
    %468 = vmatpush2.xpose.msra.mxu0 0.0
    %469 = vmatprep.subr.mxu0 0.0
    %470 = vmatpush2.xpose.msra.mxu0 0.0
    %471 = vmatprep.subr.mxu0 0.0
    %472 = vmatpush2.xpose.msra.mxu0 0.0
    %473 = vmatprep.subr.mxu0 0.0
    %474 = vmatpush2.xpose.msra.mxu0 0.0
    %475 = vmatprep.subr.mxu0 0.0
    %476 = vmatpush2.xpose.msra.mxu0 0.0
    %477 = vmatprep.subr.mxu0 0.0
    %478 = vmatpush2.xpose.msra.mxu0 0.0
    %479 = vmatprep.subr.mxu0 0.0
    %480 = vmatpush2.xpose.msra.mxu0 0.0
    %481 = vmatprep.subr.mxu0 0.0
    %482 = vmatpush2.xpose.msra.mxu0 0.0
    %483 = vmatprep.subr.mxu0 0.0
    %484 = vmatpush2.xpose.msra.mxu0 0.0
    %485 = vmatprep.mubr.f32.mxu0 0.0
    %v486 = vand.u32 %v41, 4294901760
    %487 = vmatmul.mubr.f32.gmra.mxu0 %v486
    %v488 = vpop.f32.mrf.mxu0
    %v489 = vadd.f32 %v417, %v488
    %v490 = vpop.f32.mrf.mxu0
    %491 = vdwg.mxu0
    %vm492 = vcmask 57344
    %493 = vst.msk [vmem:[#allocation7] sm:$0x1] %vm492, %v489
    // Predicated region
    $region18: #{tpu_custom_call.1} parent=1 // pred_check
      _
    $region19: #{tpu_custom_call.1} parent=1 // pred_check_branch
      %495 = sbr.rel (0) target = $region21
    $region20: #{tpu_custom_call.1} parent=1 // pred_region
      %s497 = ssub.s32 16, 16
      %498 = vsyncadd [#allocation4], %s497
      %s500 = sshll.u32 [#allocation7], 4
      %s501 = int_to_ptr.vmem [resolvable:$true] %s500
      %503 = dma.vmem_to_hbm [thread:$0]  %s501, 16, %s2, [#allocation4]
    $region21: #{tpu_custom_call.1} parent=1 // pred_fallthru
      _
    // Predicated region
    $region22: #{tpu_custom_call.1} parent=1 // pred_check
      _
    $region23: #{tpu_custom_call.1} parent=1 // pred_check_branch
      %505 = sbr.rel (0) target = $region25
    $region24: #{tpu_custom_call.1} parent=1 // pred_region
      %506 = dma.done [#allocation4], 16
    $region25: #{tpu_custom_call.1} parent=1 // pred_fallthru
      _
    %507 = vsyncpa [#allocation3], 1
    %508 = vsyncpa [#allocation6], 1
    %509 = vsyncpa [#allocation4], 1

</llo_original>
